<compile_context>
chip_gen: v6e
topology: v6e:2x2x1
jax: 0.10.0
libtpu: 0.0.40
codegen_flags: <defaults>
</compile_context>

<pallas_src>
import jax
import jax.numpy as jnp
from jax.experimental import pallas as pl
from jax.experimental.pallas import tpu as pltpu


def _round_up(x: int, m: int) -> int:
    return (x + m - 1) // m * m


def _mlp_kernel(x_ref, w1_ref, w2_ref, o_ref):
    # hidden = relu(x @ w1)   (MXU, f32 accumulate; relu rides the free VPU slot)
    h = jnp.dot(x_ref[...], w1_ref[...], preferred_element_type=jnp.float32)
    h = jnp.maximum(h, 0.0)  # torch.clamp(x, min=0)
    # out = hidden @ w2       (MXU, lane-dense padded N dim -> unmasked stores)
    o = jnp.dot(h, w2_ref[...], preferred_element_type=jnp.float32)
    o_ref[...] = o.astype(o_ref.dtype)


@jax.jit
def model_forward(x, w1, w2):
    B, K = x.shape
    K1, H = w1.shape
    H2, O = w2.shape
    assert K1 == K and H2 == H

    # Lane-dense padding of hidden / output dims (exact, see header comment).
    H_pad = _round_up(H, 128)
    O_pad = _round_up(O, 128)

    # Batch tile: multiple of 8, as large as reasonable but capped so
    # 2*TM*K*4B (x, double-buffered) + K*H_pad*4B + H_pad*O_pad*4B (weights)
    # + 2*TM*O_pad*4B (out, double-buffered) fits comfortably in VMEM.
    TM = min(512, _round_up(B, 8))
    B_pad = _round_up(B, TM)

    x_p = x if B_pad == B else jnp.pad(x, ((0, B_pad - B), (0, 0)))
    w1_p = w1 if H_pad == H else jnp.pad(w1, ((0, 0), (0, H_pad - H)))
    w2_p = (
        w2
        if (H_pad == H and O_pad == O)
        else jnp.pad(w2, ((0, H_pad - H), (0, O_pad - O)))
    )

    grid = (B_pad // TM,)

    flops = 2 * B_pad * K * H_pad + 2 * B_pad * H_pad * O_pad
    bytes_accessed = 4 * (B_pad * K + K * H_pad + H_pad * O_pad + B_pad * O_pad)

    out_p = pl.pallas_call(
        _mlp_kernel,
        out_shape=jax.ShapeDtypeStruct((B_pad, O_pad), x.dtype),
        grid_spec=pltpu.PrefetchScalarGridSpec(
            num_scalar_prefetch=0,
            grid=grid,
            in_specs=[
                # x tiles march over the batch axis (double-buffered by Pallas)
                pl.BlockSpec((TM, K), lambda i: (i, 0)),
                # weights stay VMEM-resident across all grid steps
                pl.BlockSpec((K, H_pad), lambda i: (0, 0)),
                pl.BlockSpec((H_pad, O_pad), lambda i: (0, 0)),
            ],
            out_specs=pl.BlockSpec((TM, O_pad), lambda i: (i, 0)),
        ),
        compiler_params=pltpu.CompilerParams(
            dimension_semantics=("parallel",),  # shard batch tiles across TCs
            vmem_limit_bytes=48 * 1024 * 1024,
        ),
        cost_estimate=pl.CostEstimate(
            flops=flops, transcendentals=0, bytes_accessed=bytes_accessed
        ),
    )(x_p, w1_p, w2_p)

    # Strip batch / output padding.
    return out_p[:B, :O]


if __name__ == "__main__":
    # Shapes from the original module: batch_n=100, input_data=1000,
    # hidden_layer=100, output_data=10 (small enough to run directly).
    batch_n, input_data, hidden_layer, output_data = 100, 1000, 100, 10

    key = jax.random.PRNGKey(0)
    kx, k1, k2 = jax.random.split(key, 3)
    x = jax.random.normal(kx, (batch_n, input_data), dtype=jnp.float32)
    w1 = jax.random.normal(k1, (input_data, hidden_layer), dtype=jnp.float32)
    w2 = jax.random.normal(k2, (hidden_layer, output_data), dtype=jnp.float32)

    out = jax.block_until_ready(model_forward(x, w1, w2))

    # Reference check (plain JAX).  Slightly relaxed tolerance: kernel and
    # reference run f32 matmuls with different accumulation orders over K=1000.
    ref = jnp.maximum(x @ w1, 0.0) @ w2
    assert out.shape == (batch_n, output_data)
    assert jnp.allclose(out, ref, atol=1e-2, rtol=2e-2)

    print("KERNEL_OK")
</pallas_src>

<mosaic_0001>
module attributes {stable_mosaic.version = 11 : i64} {
  func.func @_mlp_kernel(%arg0: i32, %arg1: memref<104x1000xf32, #tpu.memory_space<vmem>>, %arg2: memref<1000x128xf32, #tpu.memory_space<vmem>>, %arg3: memref<128x128xf32, #tpu.memory_space<vmem>>, %arg4: memref<104x128xf32, #tpu.memory_space<vmem>>) attributes {dimension_semantics = [#tpu.dimension_semantics<parallel>], iteration_bounds = array<i64: 1>, scalar_prefetch = 0 : i64, scratch_operands = 0 : i64, tpu.core_type = #tpu.core_type<tc>, window_params = [{transform_indices = @transform_0, window_bounds = array<i64: 104, 1000>}, {pipeline_mode = #tpu.pipeline_mode<synchronous>, transform_indices = @transform_1, window_bounds = array<i64: 1000, 128>}, {pipeline_mode = #tpu.pipeline_mode<synchronous>, transform_indices = @transform_2, window_bounds = array<i64: 128, 128>}, {transform_indices = @transform_3, window_bounds = array<i64: 104, 128>}]} {
    %c0 = arith.constant 0 : index
    %c0_0 = arith.constant 0 : index
    %0 = vector.load %arg1[%c0, %c0_0] : memref<104x1000xf32, #tpu.memory_space<vmem>>, vector<104x1000xf32>
    %c0_1 = arith.constant 0 : index
    %c0_2 = arith.constant 0 : index
    %1 = vector.load %arg2[%c0_1, %c0_2] : memref<1000x128xf32, #tpu.memory_space<vmem>>, vector<1000x128xf32>
    %cst = arith.constant dense<0.000000e+00> : vector<104x128xf32>
    %2 = tpu.matmul %0, %1, %cst {dimension_numbers = #tpu.dot_dimension_numbers<[1], [0], [0], [1], [0, 0, 1, 1], [], []>} : vector<104x1000xf32>, vector<1000x128xf32>, vector<104x128xf32> -> vector<104x128xf32>
    %cst_3 = arith.constant 0.000000e+00 : f32
    %3 = vector.broadcast %cst_3 : f32 to vector<104x128xf32>
    %4 = arith.maximumf %2, %3 : vector<104x128xf32>
    %c0_4 = arith.constant 0 : index
    %c0_5 = arith.constant 0 : index
    %5 = vector.load %arg3[%c0_4, %c0_5] : memref<128x128xf32, #tpu.memory_space<vmem>>, vector<128x128xf32>
    %cst_6 = arith.constant dense<0.000000e+00> : vector<104x128xf32>
    %6 = tpu.matmul %4, %5, %cst_6 {dimension_numbers = #tpu.dot_dimension_numbers<[1], [0], [0], [1], [0, 0, 1, 1], [], []>} : vector<104x128xf32>, vector<128x128xf32>, vector<104x128xf32> -> vector<104x128xf32>
    %c0_7 = arith.constant 0 : index
    %c0_8 = arith.constant 0 : index
    %7 = vector.load %arg4[%c0_7, %c0_8] : memref<104x128xf32, #tpu.memory_space<vmem>>, vector<104x128xf32>
    tpu.vector_store %arg4[%c0_7, %c0_8], %6 {strides = array<i32>} : memref<104x128xf32, #tpu.memory_space<vmem>>, vector<104x128xf32>,
    return
  }
  func.func @transform_0(%arg0: i32) -> (i32, i32) {
    %c0_i32 = arith.constant 0 : i32
    %c0_i32_0 = arith.constant 0 : i32
    return %arg0, %c0_i32 : i32, i32
  }
  func.func @transform_1(%arg0: i32) -> (i32, i32) {
    %c0_i32 = arith.constant 0 : i32
    %c0_i32_0 = arith.constant 0 : i32
    %c0_i32_1 = arith.constant 0 : i32
    return %c0_i32, %c0_i32_0 : i32, i32
  }
  func.func @transform_2(%arg0: i32) -> (i32, i32) {
    %c0_i32 = arith.constant 0 : i32
    %c0_i32_0 = arith.constant 0 : i32
    %c0_i32_1 = arith.constant 0 : i32
    return %c0_i32, %c0_i32_0 : i32, i32
  }
  func.func @transform_3(%arg0: i32) -> (i32, i32) {
    %c0_i32 = arith.constant 0 : i32
    %c0_i32_0 = arith.constant 0 : i32
    return %arg0, %c0_i32 : i32, i32
  }
}

</mosaic_0001>

<llo_original>
// kernel: model_forward.1
$region0: #{model_forward.1}
  #allocation0 [shape = 'u32[]', space=smem, size = 0x4, offset = 0x4, fixed_abs, tag = 'smem constant byte address 0x4 - core index']
  #allocation1 [shape = 'u32[144,128]{1,0:T(1,128)}', space=vmem, size = 0x12000, scoped, tag = 'internal scratch']
  %s0 = inlined_call_operand.vmem [shape: f32[104,1000], index: 0, kind: input, shape index: {}]
  %s1 = inlined_call_operand.vmem [shape: f32[1000,128], index: 1, kind: input, shape index: {}]
  %s2 = inlined_call_operand.vmem [shape: f32[128,128], index: 2, kind: input, shape index: {}]
  %s3 = inlined_call_operand.vmem [shape: f32[104,128], index: 3, kind: output, shape index: {}]
  %s4 = sld [smem:[#allocation0]]
  $region22: #{model_forward.1} parent=0
    _
  %s6 = ssub.s32 1, %s4
  %s7 = scalar_select 0, %s6, %s4
  // Predicated region
  $region2: #{model_forward.1} parent=0 // pred_check
    _
  $region3: #{model_forward.1} parent=0 // pred_check_branch
    %9 = sbr.rel (0) target = $region5
  $region4: #{model_forward.1} parent=0 // pred_region
    _
  $region5: #{model_forward.1} parent=0 // pred_fallthru
    _
  // Predicated region
  $region6: #{model_forward.1} parent=0 // pred_check
    _
  $region7: #{model_forward.1} parent=0 // pred_check_branch
    %11 = sbr.rel (0) target = $region9
  $region8: #{model_forward.1} parent=0 // pred_region
    _
  $region9: #{model_forward.1} parent=0 // pred_fallthru
    _
  // Predicated region
  $region10: #{model_forward.1} parent=0 // pred_check
    _
  $region11: #{model_forward.1} parent=0 // pred_check_branch
    %13 = sbr.rel (0) target = $region13
  $region12: #{model_forward.1} parent=0 // pred_region
    _
  $region13: #{model_forward.1} parent=0 // pred_fallthru
    _
  %v14 = vld [vmem:[%s0] sm:$0xff]
  %v15 = vld [vmem:[%s0 + $0x8] sm:$0xff]
  %v16 = vld [vmem:[%s0 + $0x10] sm:$0xff]
  %v17 = vld [vmem:[%s0 + $0x18] sm:$0xff]
  %v18 = vld [vmem:[%s0 + $0x20] sm:$0xff]
  %v19 = vld [vmem:[%s0 + $0x28] sm:$0xff]
  %v20 = vld [vmem:[%s0 + $0x30] sm:$0xff]
  %v21 = vld [vmem:[%s0 + $0x38] sm:$0xff]
  %v22 = vld [vmem:[%s0 + $0x40] sm:$0xff]
  %v23 = vld [vmem:[%s0 + $0x48] sm:$0xff]
  %v24 = vld [vmem:[%s0 + $0x50] sm:$0xff]
  %v25 = vld [vmem:[%s0 + $0x58] sm:$0xff]
  %v26 = vld [vmem:[%s0 + $0x60] sm:$0xff]
  %v27 = vld [vmem:[%s0 + $0x68] sm:$0xff]
  %v28 = vld [vmem:[%s0 + $0x70] sm:$0xff]
  %v29 = vld [vmem:[%s0 + $0x78] sm:$0xff]
  %v30 = vld [vmem:[%s0 + $0x80] sm:$0xff]
  %v31 = vld [vmem:[%s0 + $0x88] sm:$0xff]
  %v32 = vld [vmem:[%s0 + $0x90] sm:$0xff]
  %v33 = vld [vmem:[%s0 + $0x98] sm:$0xff]
  %v34 = vld [vmem:[%s0 + $0xa0] sm:$0xff]
  %v35 = vld [vmem:[%s0 + $0xa8] sm:$0xff]
  %v36 = vld [vmem:[%s0 + $0xb0] sm:$0xff]
  %v37 = vld [vmem:[%s0 + $0xb8] sm:$0xff]
  %v38 = vld [vmem:[%s0 + $0xc0] sm:$0xff]
  %v39 = vld [vmem:[%s0 + $0xc8] sm:$0xff]
  %v40 = vld [vmem:[%s0 + $0xd0] sm:$0xff]
  %v41 = vld [vmem:[%s0 + $0xd8] sm:$0xff]
  %v42 = vld [vmem:[%s0 + $0xe0] sm:$0xff]
  %v43 = vld [vmem:[%s0 + $0xe8] sm:$0xff]
  %v44 = vld [vmem:[%s0 + $0xf0] sm:$0xff]
  %v45 = vld [vmem:[%s0 + $0xf8] sm:$0xff]
  %v46 = vld [vmem:[%s0 + $0x100] sm:$0xff]
  %v47 = vld [vmem:[%s0 + $0x108] sm:$0xff]
  %v48 = vld [vmem:[%s0 + $0x110] sm:$0xff]
  %v49 = vld [vmem:[%s0 + $0x118] sm:$0xff]
  %v50 = vld [vmem:[%s0 + $0x120] sm:$0xff]
  %v51 = vld [vmem:[%s0 + $0x128] sm:$0xff]
  %v52 = vld [vmem:[%s0 + $0x130] sm:$0xff]
  %v53 = vld [vmem:[%s0 + $0x138] sm:$0xff]
  %v54 = vld [vmem:[%s0 + $0x140] sm:$0xff]
  %v55 = vld [vmem:[%s0 + $0x148] sm:$0xff]
  %v56 = vld [vmem:[%s0 + $0x150] sm:$0xff]
  %v57 = vld [vmem:[%s0 + $0x158] sm:$0xff]
  %v58 = vld [vmem:[%s0 + $0x160] sm:$0xff]
  %v59 = vld [vmem:[%s0 + $0x168] sm:$0xff]
  %v60 = vld [vmem:[%s0 + $0x170] sm:$0xff]
  %v61 = vld [vmem:[%s0 + $0x178] sm:$0xff]
  %v62 = vld [vmem:[%s0 + $0x180] sm:$0xff]
  %v63 = vld [vmem:[%s0 + $0x188] sm:$0xff]
  %v64 = vld [vmem:[%s0 + $0x190] sm:$0xff]
  %v65 = vld [vmem:[%s0 + $0x198] sm:$0xff]
  %v66 = vld [vmem:[%s0 + $0x1a0] sm:$0xff]
  %v67 = vld [vmem:[%s0 + $0x1a8] sm:$0xff]
  %v68 = vld [vmem:[%s0 + $0x1b0] sm:$0xff]
  %v69 = vld [vmem:[%s0 + $0x1b8] sm:$0xff]
  %v70 = vld [vmem:[%s0 + $0x1c0] sm:$0xff]
  %v71 = vld [vmem:[%s0 + $0x1c8] sm:$0xff]
  %v72 = vld [vmem:[%s0 + $0x1d0] sm:$0xff]
  %v73 = vld [vmem:[%s0 + $0x1d8] sm:$0xff]
  %v74 = vld [vmem:[%s0 + $0x1e0] sm:$0xff]
  %v75 = vld [vmem:[%s0 + $0x1e8] sm:$0xff]
  %v76 = vld [vmem:[%s0 + $0x1f0] sm:$0xff]
  %v77 = vld [vmem:[%s0 + $0x1f8] sm:$0xff]
  %v78 = vld [vmem:[%s0 + $0x200] sm:$0xff]
  %v79 = vld [vmem:[%s0 + $0x208] sm:$0xff]
  %v80 = vld [vmem:[%s0 + $0x210] sm:$0xff]
  %v81 = vld [vmem:[%s0 + $0x218] sm:$0xff]
  %v82 = vld [vmem:[%s0 + $0x220] sm:$0xff]
  %v83 = vld [vmem:[%s0 + $0x228] sm:$0xff]
  %v84 = vld [vmem:[%s0 + $0x230] sm:$0xff]
  %v85 = vld [vmem:[%s0 + $0x238] sm:$0xff]
  %v86 = vld [vmem:[%s0 + $0x240] sm:$0xff]
  %v87 = vld [vmem:[%s0 + $0x248] sm:$0xff]
  %v88 = vld [vmem:[%s0 + $0x250] sm:$0xff]
  %v89 = vld [vmem:[%s0 + $0x258] sm:$0xff]
  %v90 = vld [vmem:[%s0 + $0x260] sm:$0xff]
  %v91 = vld [vmem:[%s0 + $0x268] sm:$0xff]
  %v92 = vld [vmem:[%s0 + $0x270] sm:$0xff]
  %v93 = vld [vmem:[%s0 + $0x278] sm:$0xff]
  %v94 = vld [vmem:[%s0 + $0x280] sm:$0xff]
  %v95 = vld [vmem:[%s0 + $0x288] sm:$0xff]
  %v96 = vld [vmem:[%s0 + $0x290] sm:$0xff]
  %v97 = vld [vmem:[%s0 + $0x298] sm:$0xff]
  %v98 = vld [vmem:[%s0 + $0x2a0] sm:$0xff]
  %v99 = vld [vmem:[%s0 + $0x2a8] sm:$0xff]
  %v100 = vld [vmem:[%s0 + $0x2b0] sm:$0xff]
  %v101 = vld [vmem:[%s0 + $0x2b8] sm:$0xff]
  %v102 = vld [vmem:[%s0 + $0x2c0] sm:$0xff]
  %v103 = vld [vmem:[%s0 + $0x2c8] sm:$0xff]
  %v104 = vld [vmem:[%s0 + $0x2d0] sm:$0xff]
  %v105 = vld [vmem:[%s0 + $0x2d8] sm:$0xff]
  %v106 = vld [vmem:[%s0 + $0x2e0] sm:$0xff]
  %v107 = vld [vmem:[%s0 + $0x2e8] sm:$0xff]
  %v108 = vld [vmem:[%s0 + $0x2f0] sm:$0xff]
  %v109 = vld [vmem:[%s0 + $0x2f8] sm:$0xff]
  %v110 = vld [vmem:[%s0 + $0x300] sm:$0xff]
  %v111 = vld [vmem:[%s0 + $0x308] sm:$0xff]
  %v112 = vld [vmem:[%s0 + $0x310] sm:$0xff]
  %v113 = vld [vmem:[%s0 + $0x318] sm:$0xff]
  %v114 = vld [vmem:[%s0 + $0x320] sm:$0xff]
  %v115 = vld [vmem:[%s0 + $0x328] sm:$0xff]
  %v116 = vld [vmem:[%s0 + $0x330] sm:$0xff]
  %v117 = vld [vmem:[%s0 + $0x338] sm:$0xff]
  %v118 = vld [vmem:[%s1] sm:$0xff]
  %v119 = vld [vmem:[%s1 + $0x8] sm:$0xff]
  %v120 = vld [vmem:[%s1 + $0x10] sm:$0xff]
  %v121 = vld [vmem:[%s1 + $0x18] sm:$0xff]
  %v122 = vld [vmem:[%s1 + $0x20] sm:$0xff]
  %v123 = vld [vmem:[%s1 + $0x28] sm:$0xff]
  %v124 = vld [vmem:[%s1 + $0x30] sm:$0xff]
  %v125 = vld [vmem:[%s1 + $0x38] sm:$0xff]
  %v126 = vld [vmem:[%s1 + $0x40] sm:$0xff]
  %v127 = vld [vmem:[%s1 + $0x48] sm:$0xff]
  %v128 = vld [vmem:[%s1 + $0x50] sm:$0xff]
  %v129 = vld [vmem:[%s1 + $0x58] sm:$0xff]
  %v130 = vld [vmem:[%s1 + $0x60] sm:$0xff]
  %v131 = vld [vmem:[%s1 + $0x68] sm:$0xff]
  %v132 = vld [vmem:[%s1 + $0x70] sm:$0xff]
  %v133 = vld [vmem:[%s1 + $0x78] sm:$0xff]
  %v134 = vld [vmem:[%s1 + $0x80] sm:$0xff]
  %v135 = vld [vmem:[%s1 + $0x88] sm:$0xff]
  %v136 = vld [vmem:[%s1 + $0x90] sm:$0xff]
  %v137 = vld [vmem:[%s1 + $0x98] sm:$0xff]
  %v138 = vld [vmem:[%s1 + $0xa0] sm:$0xff]
  %v139 = vld [vmem:[%s1 + $0xa8] sm:$0xff]
  %v140 = vld [vmem:[%s1 + $0xb0] sm:$0xff]
  %v141 = vld [vmem:[%s1 + $0xb8] sm:$0xff]
  %v142 = vld [vmem:[%s1 + $0xc0] sm:$0xff]
  %v143 = vld [vmem:[%s1 + $0xc8] sm:$0xff]
  %v144 = vld [vmem:[%s1 + $0xd0] sm:$0xff]
  %v145 = vld [vmem:[%s1 + $0xd8] sm:$0xff]
  %v146 = vld [vmem:[%s1 + $0xe0] sm:$0xff]
  %v147 = vld [vmem:[%s1 + $0xe8] sm:$0xff]
  %v148 = vld [vmem:[%s1 + $0xf0] sm:$0xff]
  %v149 = vld [vmem:[%s1 + $0xf8] sm:$0xff]
  %v150 = vld [vmem:[%s1 + $0x100] sm:$0xff]
  %v151 = vld [vmem:[%s1 + $0x108] sm:$0xff]
  %v152 = vld [vmem:[%s1 + $0x110] sm:$0xff]
  %v153 = vld [vmem:[%s1 + $0x118] sm:$0xff]
  %v154 = vld [vmem:[%s1 + $0x120] sm:$0xff]
  %v155 = vld [vmem:[%s1 + $0x128] sm:$0xff]
  %v156 = vld [vmem:[%s1 + $0x130] sm:$0xff]
  %v157 = vld [vmem:[%s1 + $0x138] sm:$0xff]
  %v158 = vld [vmem:[%s1 + $0x140] sm:$0xff]
  %v159 = vld [vmem:[%s1 + $0x148] sm:$0xff]
  %v160 = vld [vmem:[%s1 + $0x150] sm:$0xff]
  %v161 = vld [vmem:[%s1 + $0x158] sm:$0xff]
  %v162 = vld [vmem:[%s1 + $0x160] sm:$0xff]
  %v163 = vld [vmem:[%s1 + $0x168] sm:$0xff]
  %v164 = vld [vmem:[%s1 + $0x170] sm:$0xff]
  %v165 = vld [vmem:[%s1 + $0x178] sm:$0xff]
  %v166 = vld [vmem:[%s1 + $0x180] sm:$0xff]
  %v167 = vld [vmem:[%s1 + $0x188] sm:$0xff]
  %v168 = vld [vmem:[%s1 + $0x190] sm:$0xff]
  %v169 = vld [vmem:[%s1 + $0x198] sm:$0xff]
  %v170 = vld [vmem:[%s1 + $0x1a0] sm:$0xff]
  %v171 = vld [vmem:[%s1 + $0x1a8] sm:$0xff]
  %v172 = vld [vmem:[%s1 + $0x1b0] sm:$0xff]
  %v173 = vld [vmem:[%s1 + $0x1b8] sm:$0xff]
  %v174 = vld [vmem:[%s1 + $0x1c0] sm:$0xff]
  %v175 = vld [vmem:[%s1 + $0x1c8] sm:$0xff]
  %v176 = vld [vmem:[%s1 + $0x1d0] sm:$0xff]
  %v177 = vld [vmem:[%s1 + $0x1d8] sm:$0xff]
  %v178 = vld [vmem:[%s1 + $0x1e0] sm:$0xff]
  %v179 = vld [vmem:[%s1 + $0x1e8] sm:$0xff]
  %v180 = vld [vmem:[%s1 + $0x1f0] sm:$0xff]
  %v181 = vld [vmem:[%s1 + $0x1f8] sm:$0xff]
  %v182 = vld [vmem:[%s1 + $0x200] sm:$0xff]
  %v183 = vld [vmem:[%s1 + $0x208] sm:$0xff]
  %v184 = vld [vmem:[%s1 + $0x210] sm:$0xff]
  %v185 = vld [vmem:[%s1 + $0x218] sm:$0xff]
  %v186 = vld [vmem:[%s1 + $0x220] sm:$0xff]
  %v187 = vld [vmem:[%s1 + $0x228] sm:$0xff]
  %v188 = vld [vmem:[%s1 + $0x230] sm:$0xff]
  %v189 = vld [vmem:[%s1 + $0x238] sm:$0xff]
  %v190 = vld [vmem:[%s1 + $0x240] sm:$0xff]
  %v191 = vld [vmem:[%s1 + $0x248] sm:$0xff]
  %v192 = vld [vmem:[%s1 + $0x250] sm:$0xff]
  %v193 = vld [vmem:[%s1 + $0x258] sm:$0xff]
  %v194 = vld [vmem:[%s1 + $0x260] sm:$0xff]
  %v195 = vld [vmem:[%s1 + $0x268] sm:$0xff]
  %v196 = vld [vmem:[%s1 + $0x270] sm:$0xff]
  %v197 = vld [vmem:[%s1 + $0x278] sm:$0xff]
  %v198 = vld [vmem:[%s1 + $0x280] sm:$0xff]
  %v199 = vld [vmem:[%s1 + $0x288] sm:$0xff]
  %v200 = vld [vmem:[%s1 + $0x290] sm:$0xff]
  %v201 = vld [vmem:[%s1 + $0x298] sm:$0xff]
  %v202 = vld [vmem:[%s1 + $0x2a0] sm:$0xff]
  %v203 = vld [vmem:[%s1 + $0x2a8] sm:$0xff]
  %v204 = vld [vmem:[%s1 + $0x2b0] sm:$0xff]
  %v205 = vld [vmem:[%s1 + $0x2b8] sm:$0xff]
  %v206 = vld [vmem:[%s1 + $0x2c0] sm:$0xff]
  %v207 = vld [vmem:[%s1 + $0x2c8] sm:$0xff]
  %v208 = vld [vmem:[%s1 + $0x2d0] sm:$0xff]
  %v209 = vld [vmem:[%s1 + $0x2d8] sm:$0xff]
  %v210 = vld [vmem:[%s1 + $0x2e0] sm:$0xff]
  %v211 = vld [vmem:[%s1 + $0x2e8] sm:$0xff]
  %v212 = vld [vmem:[%s1 + $0x2f0] sm:$0xff]
  %v213 = vld [vmem:[%s1 + $0x2f8] sm:$0xff]
  %v214 = vld [vmem:[%s1 + $0x300] sm:$0xff]
  %v215 = vld [vmem:[%s1 + $0x308] sm:$0xff]
  %v216 = vld [vmem:[%s1 + $0x310] sm:$0xff]
  %v217 = vld [vmem:[%s1 + $0x318] sm:$0xff]
  %v218 = vld [vmem:[%s1 + $0x320] sm:$0xff]
  %v219 = vld [vmem:[%s1 + $0x328] sm:$0xff]
  %v220 = vld [vmem:[%s1 + $0x330] sm:$0xff]
  %v221 = vld [vmem:[%s1 + $0x338] sm:$0xff]
  %v222 = vld [vmem:[%s1 + $0x340] sm:$0xff]
  %v223 = vld [vmem:[%s1 + $0x348] sm:$0xff]
  %v224 = vld [vmem:[%s1 + $0x350] sm:$0xff]
  %v225 = vld [vmem:[%s1 + $0x358] sm:$0xff]
  %v226 = vld [vmem:[%s1 + $0x360] sm:$0xff]
  %v227 = vld [vmem:[%s1 + $0x368] sm:$0xff]
  %v228 = vld [vmem:[%s1 + $0x370] sm:$0xff]
  %v229 = vld [vmem:[%s1 + $0x378] sm:$0xff]
  %v230 = vld [vmem:[%s1 + $0x380] sm:$0xff]
  %v231 = vld [vmem:[%s1 + $0x388] sm:$0xff]
  %v232 = vld [vmem:[%s1 + $0x390] sm:$0xff]
  %v233 = vld [vmem:[%s1 + $0x398] sm:$0xff]
  %v234 = vld [vmem:[%s1 + $0x3a0] sm:$0xff]
  %v235 = vld [vmem:[%s1 + $0x3a8] sm:$0xff]
  %v236 = vld [vmem:[%s1 + $0x3b0] sm:$0xff]
  %v237 = vld [vmem:[%s1 + $0x3b8] sm:$0xff]
  %v238 = vld [vmem:[%s1 + $0x3c0] sm:$0xff]
  %v239 = vld [vmem:[%s1 + $0x3c8] sm:$0xff]
  %v240 = vld [vmem:[%s1 + $0x3d0] sm:$0xff]
  %v241 = vld [vmem:[%s1 + $0x3d8] sm:$0xff]
  %v242 = vld [vmem:[%s1 + $0x3e0] sm:$0xff]
  %vm243 = vcmask 850944
  %v245 = vsel %vm243, %v21, 0
  %v248 = vsel %vm243, %v29, 0
  %v251 = vsel %vm243, %v37, 0
  %v254 = vsel %vm243, %v45, 0
  %v257 = vsel %vm243, %v53, 0
  %v260 = vsel %vm243, %v61, 0
  %v263 = vsel %vm243, %v69, 0
  %v266 = vsel %vm243, %v77, 0
  %v269 = vsel %vm243, %v85, 0
  %v272 = vsel %vm243, %v93, 0
  %v275 = vsel %vm243, %v101, 0
  %v278 = vsel %vm243, %v109, 0
  %v281 = vsel %vm243, %v117, 0
  %283 = vmatprep.subr.mxu0 0.0
  %284 = vmatpush1.msra.mxu0 %v133
  %285 = vmatprep.subr.mxu0 0.0
  %286 = vmatpush1.msra.mxu0 %v132
  %287 = vmatprep.subr.mxu0 0.0
  %288 = vmatpush1.msra.mxu0 %v131
  %289 = vmatprep.subr.mxu0 0.0
  %290 = vmatpush1.msra.mxu0 %v130
  %291 = vmatprep.subr.mxu0 0.0
  %292 = vmatpush1.msra.mxu0 %v129
  %293 = vmatprep.subr.mxu0 0.0
  %294 = vmatpush1.msra.mxu0 %v128
  %295 = vmatprep.subr.mxu0 0.0
  %296 = vmatpush1.msra.mxu0 %v127
  %297 = vmatprep.subr.mxu0 0.0
  %298 = vmatpush1.msra.mxu0 %v126
  %299 = vmatprep.subr.mxu0 0.0
  %300 = vmatpush1.msra.mxu0 %v125
  %301 = vmatprep.subr.mxu0 0.0
  %302 = vmatpush1.msra.mxu0 %v124
  %303 = vmatprep.subr.mxu0 0.0
  %304 = vmatpush1.msra.mxu0 %v123
  %305 = vmatprep.subr.mxu0 0.0
  %306 = vmatpush1.msra.mxu0 %v122
  %307 = vmatprep.subr.mxu0 0.0
  %308 = vmatpush1.msra.mxu0 %v121
  %309 = vmatprep.subr.mxu0 0.0
  %310 = vmatpush1.msra.mxu0 %v120
  %311 = vmatprep.subr.mxu0 0.0
  %312 = vmatpush1.msra.mxu0 %v119
  %313 = vmatprep.subr.mxu0 0.0
  %314 = vmatpush1.msra.mxu0 %v118
  %315 = vmatprep.subr.mxu0 0.0
  %316 = vmatpush2.msra.mxu0 %v149
  %317 = vmatprep.subr.mxu0 0.0
  %318 = vmatpush2.msra.mxu0 %v148
  %319 = vmatprep.subr.mxu0 0.0
  %320 = vmatpush2.msra.mxu0 %v147
  %321 = vmatprep.subr.mxu0 0.0
  %322 = vmatpush2.msra.mxu0 %v146
  %323 = vmatprep.subr.mxu0 0.0
  %324 = vmatpush2.msra.mxu0 %v145
  %325 = vmatprep.subr.mxu0 0.0
  %326 = vmatpush2.msra.mxu0 %v144
  %327 = vmatprep.subr.mxu0 0.0
  %328 = vmatpush2.msra.mxu0 %v143
  %329 = vmatprep.subr.mxu0 0.0
  %330 = vmatpush2.msra.mxu0 %v142
  %331 = vmatprep.subr.mxu0 0.0
  %332 = vmatpush2.msra.mxu0 %v141
  %333 = vmatprep.subr.mxu0 0.0
  %334 = vmatpush2.msra.mxu0 %v140
  %335 = vmatprep.subr.mxu0 0.0
  %336 = vmatpush2.msra.mxu0 %v139
  %337 = vmatprep.subr.mxu0 0.0
  %338 = vmatpush2.msra.mxu0 %v138
  %339 = vmatprep.subr.mxu0 0.0
  %340 = vmatpush2.msra.mxu0 %v137
  %341 = vmatprep.subr.mxu0 0.0
  %342 = vmatpush2.msra.mxu0 %v136
  %343 = vmatprep.subr.mxu0 0.0
  %344 = vmatpush2.msra.mxu0 %v135
  %345 = vmatprep.subr.mxu0 0.0
  %346 = vmatpush2.msra.mxu0 %v134
  %347 = vmatprep.mubr.f32.mxu0 %v15
  %348 = vmatmul.mubr.f32.gmra.mxu0 %v14
  %v349 = vpop.f32.mrf.mxu0
  %v350 = vadd.f32 0.0, %v349
  %v351 = vpop.f32.mrf.mxu0
  %352 = vmatprep.mubr.f32.mxu0 %v23
  %353 = vmatmul.mubr.f32.gmra.mxu0 %v22
  %v354 = vpop.f32.mrf.mxu0
  %v355 = vadd.f32 0.0, %v354
  %v356 = vpop.f32.mrf.mxu0
  %357 = vmatprep.mubr.f32.mxu0 %v31
  %358 = vmatmul.mubr.f32.gmra.mxu0 %v30
  %v359 = vpop.f32.mrf.mxu0
  %v360 = vadd.f32 0.0, %v359
  %v361 = vpop.f32.mrf.mxu0
  %362 = vmatprep.mubr.f32.mxu0 %v39
  %363 = vmatmul.mubr.f32.gmra.mxu0 %v38
  %v364 = vpop.f32.mrf.mxu0
  %v365 = vadd.f32 0.0, %v364
  %v366 = vpop.f32.mrf.mxu0
  %367 = vmatprep.mubr.f32.mxu0 %v47
  %368 = vmatmul.mubr.f32.gmra.mxu0 %v46
  %v369 = vpop.f32.mrf.mxu0
  %v370 = vadd.f32 0.0, %v369
  %v371 = vpop.f32.mrf.mxu0
  %372 = vmatprep.mubr.f32.mxu0 %v55
  %373 = vmatmul.mubr.f32.gmra.mxu0 %v54
  %v374 = vpop.f32.mrf.mxu0
  %v375 = vadd.f32 0.0, %v374
  %v376 = vpop.f32.mrf.mxu0
  %377 = vmatprep.mubr.f32.mxu0 %v63
  %378 = vmatmul.mubr.f32.gmra.mxu0 %v62
  %v379 = vpop.f32.mrf.mxu0
  %v380 = vadd.f32 0.0, %v379
  %v381 = vpop.f32.mrf.mxu0
  %382 = vmatprep.mubr.f32.mxu0 %v71
  %383 = vmatmul.mubr.f32.gmra.mxu0 %v70
  %v384 = vpop.f32.mrf.mxu0
  %v385 = vadd.f32 0.0, %v384
  %v386 = vpop.f32.mrf.mxu0
  %387 = vmatprep.mubr.f32.mxu0 %v79
  %388 = vmatmul.mubr.f32.gmra.mxu0 %v78
  %v389 = vpop.f32.mrf.mxu0
  %v390 = vadd.f32 0.0, %v389
  %v391 = vpop.f32.mrf.mxu0
  %392 = vmatprep.mubr.f32.mxu0 %v87
  %393 = vmatmul.mubr.f32.gmra.mxu0 %v86
  %v394 = vpop.f32.mrf.mxu0
  %v395 = vadd.f32 0.0, %v394
  %v396 = vpop.f32.mrf.mxu0
  %397 = vmatprep.mubr.f32.mxu0 %v95
  %398 = vmatmul.mubr.f32.gmra.mxu0 %v94
  %v399 = vpop.f32.mrf.mxu0
  %v400 = vadd.f32 0.0, %v399
  %v401 = vpop.f32.mrf.mxu0
  %402 = vmatprep.mubr.f32.mxu0 %v103
  %403 = vmatmul.mubr.f32.gmra.mxu0 %v102
  %v404 = vpop.f32.mrf.mxu0
  %v405 = vadd.f32 0.0, %v404
  %v406 = vpop.f32.mrf.mxu0
  %407 = vmatprep.mubr.f32.mxu0 %v111
  %408 = vmatmul.mubr.f32.gmra.mxu0 %v110
  %v409 = vpop.f32.mrf.mxu0
  %v410 = vadd.f32 0.0, %v409
  %v411 = vpop.f32.mrf.mxu0
  %412 = vdwg.mxu0
  %413 = vmatprep.subr.mxu0 0.0
  %414 = vmatpush1.msra.mxu0 %v165
  %415 = vmatprep.subr.mxu0 0.0
  %416 = vmatpush1.msra.mxu0 %v164
  %417 = vmatprep.subr.mxu0 0.0
  %418 = vmatpush1.msra.mxu0 %v163
  %419 = vmatprep.subr.mxu0 0.0
  %420 = vmatpush1.msra.mxu0 %v162
  %421 = vmatprep.subr.mxu0 0.0
  %422 = vmatpush1.msra.mxu0 %v161
  %423 = vmatprep.subr.mxu0 0.0
  %424 = vmatpush1.msra.mxu0 %v160
  %425 = vmatprep.subr.mxu0 0.0
  %426 = vmatpush1.msra.mxu0 %v159
  %427 = vmatprep.subr.mxu0 0.0
  %428 = vmatpush1.msra.mxu0 %v158
  %429 = vmatprep.subr.mxu0 0.0
  %430 = vmatpush1.msra.mxu0 %v157
  %431 = vmatprep.subr.mxu0 0.0
  %432 = vmatpush1.msra.mxu0 %v156
  %433 = vmatprep.subr.mxu0 0.0
  %434 = vmatpush1.msra.mxu0 %v155
  %435 = vmatprep.subr.mxu0 0.0
  %436 = vmatpush1.msra.mxu0 %v154
  %437 = vmatprep.subr.mxu0 0.0
  %438 = vmatpush1.msra.mxu0 %v153
  %439 = vmatprep.subr.mxu0 0.0
  %440 = vmatpush1.msra.mxu0 %v152
  %441 = vmatprep.subr.mxu0 0.0
  %442 = vmatpush1.msra.mxu0 %v151
  %443 = vmatprep.subr.mxu0 0.0
  %444 = vmatpush1.msra.mxu0 %v150
  %445 = vmatprep.subr.mxu0 0.0
  %446 = vmatpush2.msra.mxu0 %v181
  %447 = vmatprep.subr.mxu0 0.0
  %448 = vmatpush2.msra.mxu0 %v180
  %449 = vmatprep.subr.mxu0 0.0
  %450 = vmatpush2.msra.mxu0 %v179
  %451 = vmatprep.subr.mxu0 0.0
  %452 = vmatpush2.msra.mxu0 %v178
  %453 = vmatprep.subr.mxu0 0.0
  %454 = vmatpush2.msra.mxu0 %v177
  %455 = vmatprep.subr.mxu0 0.0
  %456 = vmatpush2.msra.mxu0 %v176
  %457 = vmatprep.subr.mxu0 0.0
  %458 = vmatpush2.msra.mxu0 %v175
  %459 = vmatprep.subr.mxu0 0.0
  %460 = vmatpush2.msra.mxu0 %v174
  %461 = vmatprep.subr.mxu0 0.0
  %462 = vmatpush2.msra.mxu0 %v173
  %463 = vmatprep.subr.mxu0 0.0
  %464 = vmatpush2.msra.mxu0 %v172
  %465 = vmatprep.subr.mxu0 0.0
  %466 = vmatpush2.msra.mxu0 %v171
  %467 = vmatprep.subr.mxu0 0.0
  %468 = vmatpush2.msra.mxu0 %v170
  %469 = vmatprep.subr.mxu0 0.0
  %470 = vmatpush2.msra.mxu0 %v169
  %471 = vmatprep.subr.mxu0 0.0
  %472 = vmatpush2.msra.mxu0 %v168
  %473 = vmatprep.subr.mxu0 0.0
  %474 = vmatpush2.msra.mxu0 %v167
  %475 = vmatprep.subr.mxu0 0.0
  %476 = vmatpush2.msra.mxu0 %v166
  %477 = vmatprep.mubr.f32.mxu0 %v17
  %478 = vmatmul.mubr.f32.gmra.mxu0 %v16
  %v479 = vpop.f32.mrf.mxu0
  %v480 = vadd.f32 %v350, %v479
  %v481 = vpop.f32.mrf.mxu0
  %482 = vmatprep.mubr.f32.mxu0 %v25
  %483 = vmatmul.mubr.f32.gmra.mxu0 %v24
  %v484 = vpop.f32.mrf.mxu0
  %v485 = vadd.f32 %v355, %v484
  %v486 = vpop.f32.mrf.mxu0
  %487 = vmatprep.mubr.f32.mxu0 %v33
  %488 = vmatmul.mubr.f32.gmra.mxu0 %v32
  %v489 = vpop.f32.mrf.mxu0
  %v490 = vadd.f32 %v360, %v489
  %v491 = vpop.f32.mrf.mxu0
  %492 = vmatprep.mubr.f32.mxu0 %v41
  %493 = vmatmul.mubr.f32.gmra.mxu0 %v40
  %v494 = vpop.f32.mrf.mxu0
  %v495 = vadd.f32 %v365, %v494
  %v496 = vpop.f32.mrf.mxu0
  %497 = vmatprep.mubr.f32.mxu0 %v49
  %498 = vmatmul.mubr.f32.gmra.mxu0 %v48
  %v499 = vpop.f32.mrf.mxu0
  %v500 = vadd.f32 %v370, %v499
  %v501 = vpop.f32.mrf.mxu0
  %502 = vmatprep.mubr.f32.mxu0 %v57
  %503 = vmatmul.mubr.f32.gmra.mxu0 %v56
  %v504 = vpop.f32.mrf.mxu0
  %v505 = vadd.f32 %v375, %v504
  %v506 = vpop.f32.mrf.mxu0
  %507 = vmatprep.mubr.f32.mxu0 %v65
  %508 = vmatmul.mubr.f32.gmra.mxu0 %v64
  %v509 = vpop.f32.mrf.mxu0
  %v510 = vadd.f32 %v380, %v509
  %v511 = vpop.f32.mrf.mxu0
  %512 = vmatprep.mubr.f32.mxu0 %v73
  %513 = vmatmul.mubr.f32.gmra.mxu0 %v72
  %v514 = vpop.f32.mrf.mxu0
  %v515 = vadd.f32 %v385, %v514
  %v516 = vpop.f32.mrf.mxu0
  %517 = vmatprep.mubr.f32.mxu0 %v81
  %518 = vmatmul.mubr.f32.gmra.mxu0 %v80
  %v519 = vpop.f32.mrf.mxu0
  %v520 = vadd.f32 %v390, %v519
  %v521 = vpop.f32.mrf.mxu0
  %522 = vmatprep.mubr.f32.mxu0 %v89
  %523 = vmatmul.mubr.f32.gmra.mxu0 %v88
  %v524 = vpop.f32.mrf.mxu0
  %v525 = vadd.f32 %v395, %v524
  %v526 = vpop.f32.mrf.mxu0
  %527 = vmatprep.mubr.f32.mxu0 %v97
  %528 = vmatmul.mubr.f32.gmra.mxu0 %v96
  %v529 = vpop.f32.mrf.mxu0
  %v530 = vadd.f32 %v400, %v529
  %v531 = vpop.f32.mrf.mxu0
  %532 = vmatprep.mubr.f32.mxu0 %v105
  %533 = vmatmul.mubr.f32.gmra.mxu0 %v104
  %v534 = vpop.f32.mrf.mxu0
  %v535 = vadd.f32 %v405, %v534
  %v536 = vpop.f32.mrf.mxu0
  %537 = vmatprep.mubr.f32.mxu0 %v113
  %538 = vmatmul.mubr.f32.gmra.mxu0 %v112
  %v539 = vpop.f32.mrf.mxu0
  %v540 = vadd.f32 %v410, %v539
  %v541 = vpop.f32.mrf.mxu0
  %542 = vdwg.mxu0
  %543 = vmatprep.subr.mxu0 0.0
  %544 = vmatpush1.msra.mxu0 %v197
  %545 = vmatprep.subr.mxu0 0.0
  %546 = vmatpush1.msra.mxu0 %v196
  %547 = vmatprep.subr.mxu0 0.0
  %548 = vmatpush1.msra.mxu0 %v195
  %549 = vmatprep.subr.mxu0 0.0
  %550 = vmatpush1.msra.mxu0 %v194
  %551 = vmatprep.subr.mxu0 0.0
  %552 = vmatpush1.msra.mxu0 %v193
  %553 = vmatprep.subr.mxu0 0.0
  %554 = vmatpush1.msra.mxu0 %v192
  %555 = vmatprep.subr.mxu0 0.0
  %556 = vmatpush1.msra.mxu0 %v191
  %557 = vmatprep.subr.mxu0 0.0
  %558 = vmatpush1.msra.mxu0 %v190
  %559 = vmatprep.subr.mxu0 0.0
  %560 = vmatpush1.msra.mxu0 %v189
  %561 = vmatprep.subr.mxu0 0.0
  %562 = vmatpush1.msra.mxu0 %v188
  %563 = vmatprep.subr.mxu0 0.0
  %564 = vmatpush1.msra.mxu0 %v187
  %565 = vmatprep.subr.mxu0 0.0
  %566 = vmatpush1.msra.mxu0 %v186
  %567 = vmatprep.subr.mxu0 0.0
  %568 = vmatpush1.msra.mxu0 %v185
  %569 = vmatprep.subr.mxu0 0.0
  %570 = vmatpush1.msra.mxu0 %v184
  %571 = vmatprep.subr.mxu0 0.0
  %572 = vmatpush1.msra.mxu0 %v183
  %573 = vmatprep.subr.mxu0 0.0
  %574 = vmatpush1.msra.mxu0 %v182
  %575 = vmatprep.subr.mxu0 0.0
  %576 = vmatpush2.msra.mxu0 %v213
  %577 = vmatprep.subr.mxu0 0.0
  %578 = vmatpush2.msra.mxu0 %v212
  %579 = vmatprep.subr.mxu0 0.0
  %580 = vmatpush2.msra.mxu0 %v211
  %581 = vmatprep.subr.mxu0 0.0
  %582 = vmatpush2.msra.mxu0 %v210
  %583 = vmatprep.subr.mxu0 0.0
  %584 = vmatpush2.msra.mxu0 %v209
  %585 = vmatprep.subr.mxu0 0.0
  %586 = vmatpush2.msra.mxu0 %v208
  %587 = vmatprep.subr.mxu0 0.0
  %588 = vmatpush2.msra.mxu0 %v207
  %589 = vmatprep.subr.mxu0 0.0
  %590 = vmatpush2.msra.mxu0 %v206
  %591 = vmatprep.subr.mxu0 0.0
  %592 = vmatpush2.msra.mxu0 %v205
  %593 = vmatprep.subr.mxu0 0.0
  %594 = vmatpush2.msra.mxu0 %v204
  %595 = vmatprep.subr.mxu0 0.0
  %596 = vmatpush2.msra.mxu0 %v203
  %597 = vmatprep.subr.mxu0 0.0
  %598 = vmatpush2.msra.mxu0 %v202
  %599 = vmatprep.subr.mxu0 0.0
  %600 = vmatpush2.msra.mxu0 %v201
  %601 = vmatprep.subr.mxu0 0.0
  %602 = vmatpush2.msra.mxu0 %v200
  %603 = vmatprep.subr.mxu0 0.0
  %604 = vmatpush2.msra.mxu0 %v199
  %605 = vmatprep.subr.mxu0 0.0
  %606 = vmatpush2.msra.mxu0 %v198
  %607 = vmatprep.mubr.f32.mxu0 %v19
  %608 = vmatmul.mubr.f32.gmra.mxu0 %v18
  %v609 = vpop.f32.mrf.mxu0
  %v610 = vadd.f32 %v480, %v609
  %v611 = vpop.f32.mrf.mxu0
  %612 = vmatprep.mubr.f32.mxu0 %v27
  %613 = vmatmul.mubr.f32.gmra.mxu0 %v26
  %v614 = vpop.f32.mrf.mxu0
  %v615 = vadd.f32 %v485, %v614
  %v616 = vpop.f32.mrf.mxu0
  %617 = vmatprep.mubr.f32.mxu0 %v35
  %618 = vmatmul.mubr.f32.gmra.mxu0 %v34
  %v619 = vpop.f32.mrf.mxu0
  %v620 = vadd.f32 %v490, %v619
  %v621 = vpop.f32.mrf.mxu0
  %622 = vmatprep.mubr.f32.mxu0 %v43
  %623 = vmatmul.mubr.f32.gmra.mxu0 %v42
  %v624 = vpop.f32.mrf.mxu0
  %v625 = vadd.f32 %v495, %v624
  %v626 = vpop.f32.mrf.mxu0
  %627 = vmatprep.mubr.f32.mxu0 %v51
  %628 = vmatmul.mubr.f32.gmra.mxu0 %v50
  %v629 = vpop.f32.mrf.mxu0
  %v630 = vadd.f32 %v500, %v629
  %v631 = vpop.f32.mrf.mxu0
  %632 = vmatprep.mubr.f32.mxu0 %v59
  %633 = vmatmul.mubr.f32.gmra.mxu0 %v58
  %v634 = vpop.f32.mrf.mxu0
  %v635 = vadd.f32 %v505, %v634
  %v636 = vpop.f32.mrf.mxu0
  %637 = vmatprep.mubr.f32.mxu0 %v67
  %638 = vmatmul.mubr.f32.gmra.mxu0 %v66
  %v639 = vpop.f32.mrf.mxu0
  %v640 = vadd.f32 %v510, %v639
  %v641 = vpop.f32.mrf.mxu0
  %642 = vmatprep.mubr.f32.mxu0 %v75
  %643 = vmatmul.mubr.f32.gmra.mxu0 %v74
  %v644 = vpop.f32.mrf.mxu0
  %v645 = vadd.f32 %v515, %v644
  %v646 = vpop.f32.mrf.mxu0
  %647 = vmatprep.mubr.f32.mxu0 %v83
  %648 = vmatmul.mubr.f32.gmra.mxu0 %v82
  %v649 = vpop.f32.mrf.mxu0
  %v650 = vadd.f32 %v520, %v649
  %v651 = vpop.f32.mrf.mxu0
  %652 = vmatprep.mubr.f32.mxu0 %v91
  %653 = vmatmul.mubr.f32.gmra.mxu0 %v90
  %v654 = vpop.f32.mrf.mxu0
  %v655 = vadd.f32 %v525, %v654
  %v656 = vpop.f32.mrf.mxu0
  %657 = vmatprep.mubr.f32.mxu0 %v99
  %658 = vmatmul.mubr.f32.gmra.mxu0 %v98
  %v659 = vpop.f32.mrf.mxu0
  %v660 = vadd.f32 %v530, %v659
  %v661 = vpop.f32.mrf.mxu0
  %662 = vmatprep.mubr.f32.mxu0 %v107
  %663 = vmatmul.mubr.f32.gmra.mxu0 %v106
  %v664 = vpop.f32.mrf.mxu0
  %v665 = vadd.f32 %v535, %v664
  %v666 = vpop.f32.mrf.mxu0
  %667 = vmatprep.mubr.f32.mxu0 %v115
  %668 = vmatmul.mubr.f32.gmra.mxu0 %v114
  %v669 = vpop.f32.mrf.mxu0
  %v670 = vadd.f32 %v540, %v669
  %v671 = vpop.f32.mrf.mxu0
  %672 = vdwg.mxu0
  %673 = vmatprep.subr.mxu0 0.0
  %674 = vmatpush1.msra.mxu0 %v229
  %675 = vmatprep.subr.mxu0 0.0
  %676 = vmatpush1.msra.mxu0 %v228
  %677 = vmatprep.subr.mxu0 0.0
  %678 = vmatpush1.msra.mxu0 %v227
  %679 = vmatprep.subr.mxu0 0.0
  %680 = vmatpush1.msra.mxu0 %v226
  %681 = vmatprep.subr.mxu0 0.0
  %682 = vmatpush1.msra.mxu0 %v225
  %683 = vmatprep.subr.mxu0 0.0
  %684 = vmatpush1.msra.mxu0 %v224
  %685 = vmatprep.subr.mxu0 0.0
  %686 = vmatpush1.msra.mxu0 %v223
  %687 = vmatprep.subr.mxu0 0.0
  %688 = vmatpush1.msra.mxu0 %v222
  %689 = vmatprep.subr.mxu0 0.0
  %690 = vmatpush1.msra.mxu0 %v221
  %691 = vmatprep.subr.mxu0 0.0
  %692 = vmatpush1.msra.mxu0 %v220
  %693 = vmatprep.subr.mxu0 0.0
  %694 = vmatpush1.msra.mxu0 %v219
  %695 = vmatprep.subr.mxu0 0.0
  %696 = vmatpush1.msra.mxu0 %v218
  %697 = vmatprep.subr.mxu0 0.0
  %698 = vmatpush1.msra.mxu0 %v217
  %699 = vmatprep.subr.mxu0 0.0
  %700 = vmatpush1.msra.mxu0 %v216
  %701 = vmatprep.subr.mxu0 0.0
  %702 = vmatpush1.msra.mxu0 %v215
  %703 = vmatprep.subr.mxu0 0.0
  %704 = vmatpush1.msra.mxu0 %v214
  %705 = vmatprep.subr.mxu0 0.0
  %706 = vmatpush2.msra.mxu0 0.0
  %707 = vmatprep.subr.mxu0 0.0
  %708 = vmatpush2.msra.mxu0 0.0
  %709 = vmatprep.subr.mxu0 0.0
  %710 = vmatpush2.msra.mxu0 0.0
  %711 = vmatprep.subr.mxu0 0.0
  %712 = vmatpush2.msra.mxu0 %v242
  %713 = vmatprep.subr.mxu0 0.0
  %714 = vmatpush2.msra.mxu0 %v241
  %715 = vmatprep.subr.mxu0 0.0
  %716 = vmatpush2.msra.mxu0 %v240
  %717 = vmatprep.subr.mxu0 0.0
  %718 = vmatpush2.msra.mxu0 %v239
  %719 = vmatprep.subr.mxu0 0.0
  %720 = vmatpush2.msra.mxu0 %v238
  %721 = vmatprep.subr.mxu0 0.0
  %722 = vmatpush2.msra.mxu0 %v237
  %723 = vmatprep.subr.mxu0 0.0
  %724 = vmatpush2.msra.mxu0 %v236
  %725 = vmatprep.subr.mxu0 0.0
  %726 = vmatpush2.msra.mxu0 %v235
  %727 = vmatprep.subr.mxu0 0.0
  %728 = vmatpush2.msra.mxu0 %v234
  %729 = vmatprep.subr.mxu0 0.0
  %730 = vmatpush2.msra.mxu0 %v233
  %731 = vmatprep.subr.mxu0 0.0
  %732 = vmatpush2.msra.mxu0 %v232
  %733 = vmatprep.subr.mxu0 0.0
  %734 = vmatpush2.msra.mxu0 %v231
  %735 = vmatprep.subr.mxu0 0.0
  %736 = vmatpush2.msra.mxu0 %v230
  %737 = vmatprep.mubr.f32.mxu0 %v245
  %738 = vmatmul.mubr.f32.gmra.mxu0 %v20
  %v739 = vpop.f32.mrf.mxu0
  %v740 = vadd.f32 %v610, %v739
  %v741 = vpop.f32.mrf.mxu0
  %742 = vmatprep.mubr.f32.mxu0 %v248
  %743 = vmatmul.mubr.f32.gmra.mxu0 %v28
  %v744 = vpop.f32.mrf.mxu0
  %v745 = vadd.f32 %v615, %v744
  %v746 = vpop.f32.mrf.mxu0
  %747 = vmatprep.mubr.f32.mxu0 %v251
  %748 = vmatmul.mubr.f32.gmra.mxu0 %v36
  %v749 = vpop.f32.mrf.mxu0
  %v750 = vadd.f32 %v620, %v749
  %v751 = vpop.f32.mrf.mxu0
  %752 = vmatprep.mubr.f32.mxu0 %v254
  %753 = vmatmul.mubr.f32.gmra.mxu0 %v44
  %v754 = vpop.f32.mrf.mxu0
  %v755 = vadd.f32 %v625, %v754
  %v756 = vpop.f32.mrf.mxu0
  %757 = vmatprep.mubr.f32.mxu0 %v257
  %758 = vmatmul.mubr.f32.gmra.mxu0 %v52
  %v759 = vpop.f32.mrf.mxu0
  %v760 = vadd.f32 %v630, %v759
  %v761 = vpop.f32.mrf.mxu0
  %762 = vmatprep.mubr.f32.mxu0 %v260
  %763 = vmatmul.mubr.f32.gmra.mxu0 %v60
  %v764 = vpop.f32.mrf.mxu0
  %v765 = vadd.f32 %v635, %v764
  %v766 = vpop.f32.mrf.mxu0
  %767 = vmatprep.mubr.f32.mxu0 %v263
  %768 = vmatmul.mubr.f32.gmra.mxu0 %v68
  %v769 = vpop.f32.mrf.mxu0
  %v770 = vadd.f32 %v640, %v769
  %v771 = vpop.f32.mrf.mxu0
  %772 = vmatprep.mubr.f32.mxu0 %v266
  %773 = vmatmul.mubr.f32.gmra.mxu0 %v76
  %v774 = vpop.f32.mrf.mxu0
  %v775 = vadd.f32 %v645, %v774
  %v776 = vpop.f32.mrf.mxu0
  %777 = vmatprep.mubr.f32.mxu0 %v269
  %778 = vmatmul.mubr.f32.gmra.mxu0 %v84
  %v779 = vpop.f32.mrf.mxu0
  %v780 = vadd.f32 %v650, %v779
  %v781 = vpop.f32.mrf.mxu0
  %782 = vmatprep.mubr.f32.mxu0 %v272
  %783 = vmatmul.mubr.f32.gmra.mxu0 %v92
  %v784 = vpop.f32.mrf.mxu0
  %v785 = vadd.f32 %v655, %v784
  %v786 = vpop.f32.mrf.mxu0
  %787 = vmatprep.mubr.f32.mxu0 %v275
  %788 = vmatmul.mubr.f32.gmra.mxu0 %v100
  %v789 = vpop.f32.mrf.mxu0
  %v790 = vadd.f32 %v660, %v789
  %v791 = vpop.f32.mrf.mxu0
  %792 = vmatprep.mubr.f32.mxu0 %v278
  %793 = vmatmul.mubr.f32.gmra.mxu0 %v108
  %v794 = vpop.f32.mrf.mxu0
  %v795 = vadd.f32 %v665, %v794
  %v796 = vpop.f32.mrf.mxu0
  %797 = vmatprep.mubr.f32.mxu0 %v281
  %798 = vmatmul.mubr.f32.gmra.mxu0 %v116
  %v799 = vpop.f32.mrf.mxu0
  %v800 = vadd.f32 %v670, %v799
  %v801 = vpop.f32.mrf.mxu0
  %802 = vdwg.mxu0
  %v803 = vmax.f32 %v740, 0.0
  %v804 = vmax.f32 %v745, 0.0
  %v805 = vmax.f32 %v750, 0.0
  %v806 = vmax.f32 %v755, 0.0
  %v807 = vmax.f32 %v760, 0.0
  %v808 = vmax.f32 %v765, 0.0
  %v809 = vmax.f32 %v770, 0.0
  %v810 = vmax.f32 %v775, 0.0
  %v811 = vmax.f32 %v780, 0.0
  %v812 = vmax.f32 %v785, 0.0
  %v813 = vmax.f32 %v790, 0.0
  %v814 = vmax.f32 %v795, 0.0
  %v815 = vmax.f32 %v800, 0.0
  %v816 = vld [vmem:[%s2] sm:$0xff]
  %v817 = vld [vmem:[%s2 + $0x8] sm:$0xff]
  %v818 = vld [vmem:[%s2 + $0x10] sm:$0xff]
  %v819 = vld [vmem:[%s2 + $0x18] sm:$0xff]
  %v820 = vld [vmem:[%s2 + $0x20] sm:$0xff]
  %v821 = vld [vmem:[%s2 + $0x28] sm:$0xff]
  %v822 = vld [vmem:[%s2 + $0x30] sm:$0xff]
  %v823 = vld [vmem:[%s2 + $0x38] sm:$0xff]
  %v824 = vld [vmem:[%s2 + $0x40] sm:$0xff]
  %v825 = vld [vmem:[%s2 + $0x48] sm:$0xff]
  %v826 = vld [vmem:[%s2 + $0x50] sm:$0xff]
  %v827 = vld [vmem:[%s2 + $0x58] sm:$0xff]
  %v828 = vld [vmem:[%s2 + $0x60] sm:$0xff]
  %v829 = vld [vmem:[%s2 + $0x68] sm:$0xff]
  %v830 = vld [vmem:[%s2 + $0x70] sm:$0xff]
  %v831 = vld [vmem:[%s2 + $0x78] sm:$0xff]
  %832 = vmatprep.subr.mxu0 0.0
  %833 = vmatpush1.msra.mxu0 %v831
  %834 = vmatprep.subr.mxu0 0.0
  %835 = vmatpush1.msra.mxu0 %v830
  %836 = vmatprep.subr.mxu0 0.0
  %837 = vmatpush1.msra.mxu0 %v829
  %838 = vmatprep.subr.mxu0 0.0
  %839 = vmatpush1.msra.mxu0 %v828
  %840 = vmatprep.subr.mxu0 0.0
  %841 = vmatpush1.msra.mxu0 %v827
  %842 = vmatprep.subr.mxu0 0.0
  %843 = vmatpush1.msra.mxu0 %v826
  %844 = vmatprep.subr.mxu0 0.0
  %845 = vmatpush1.msra.mxu0 %v825
  %846 = vmatprep.subr.mxu0 0.0
  %847 = vmatpush1.msra.mxu0 %v824
  %848 = vmatprep.subr.mxu0 0.0
  %849 = vmatpush1.msra.mxu0 %v823
  %850 = vmatprep.subr.mxu0 0.0
  %851 = vmatpush1.msra.mxu0 %v822
  %852 = vmatprep.subr.mxu0 0.0
  %853 = vmatpush1.msra.mxu0 %v821
  %854 = vmatprep.subr.mxu0 0.0
  %855 = vmatpush1.msra.mxu0 %v820
  %856 = vmatprep.subr.mxu0 0.0
  %857 = vmatpush1.msra.mxu0 %v819
  %858 = vmatprep.subr.mxu0 0.0
  %859 = vmatpush1.msra.mxu0 %v818
  %860 = vmatprep.subr.mxu0 0.0
  %861 = vmatpush1.msra.mxu0 %v817
  %862 = vmatprep.subr.mxu0 0.0
  %863 = vmatpush1.msra.mxu0 %v816
  %864 = vmatprep.subr.mxu0 0.0
  %865 = vmatpush2.msra.mxu0 0.0
  %866 = vmatprep.subr.mxu0 0.0
  %867 = vmatpush2.msra.mxu0 0.0
  %868 = vmatprep.subr.mxu0 0.0
  %869 = vmatpush2.msra.mxu0 0.0
  %870 = vmatprep.subr.mxu0 0.0
  %871 = vmatpush2.msra.mxu0 0.0
  %872 = vmatprep.subr.mxu0 0.0
  %873 = vmatpush2.msra.mxu0 0.0
  %874 = vmatprep.subr.mxu0 0.0
  %875 = vmatpush2.msra.mxu0 0.0
  %876 = vmatprep.subr.mxu0 0.0
  %877 = vmatpush2.msra.mxu0 0.0
  %878 = vmatprep.subr.mxu0 0.0
  %879 = vmatpush2.msra.mxu0 0.0
  %880 = vmatprep.subr.mxu0 0.0
  %881 = vmatpush2.msra.mxu0 0.0
  %882 = vmatprep.subr.mxu0 0.0
  %883 = vmatpush2.msra.mxu0 0.0
  %884 = vmatprep.subr.mxu0 0.0
  %885 = vmatpush2.msra.mxu0 0.0
  %886 = vmatprep.subr.mxu0 0.0
  %887 = vmatpush2.msra.mxu0 0.0
  %888 = vmatprep.subr.mxu0 0.0
  %889 = vmatpush2.msra.mxu0 0.0
  %890 = vmatprep.subr.mxu0 0.0
  %891 = vmatpush2.msra.mxu0 0.0
  %892 = vmatprep.subr.mxu0 0.0
  %893 = vmatpush2.msra.mxu0 0.0
  %894 = vmatprep.subr.mxu0 0.0
  %895 = vmatpush2.msra.mxu0 0.0
  %896 = vmatprep.mubr.f32.mxu0 0.0
  %897 = vmatmul.mubr.f32.gmra.mxu0 %v803
  %v898 = vpop.f32.mrf.mxu0
  %v899 = vadd.f32 0.0, %v898
  %v900 = vpop.f32.mrf.mxu0
  %901 = vmatprep.mubr.f32.mxu0 0.0
  %902 = vmatmul.mubr.f32.gmra.mxu0 %v804
  %v903 = vpop.f32.mrf.mxu0
  %v904 = vadd.f32 0.0, %v903
  %v905 = vpop.f32.mrf.mxu0
  %906 = vmatprep.mubr.f32.mxu0 0.0
  %907 = vmatmul.mubr.f32.gmra.mxu0 %v805
  %v908 = vpop.f32.mrf.mxu0
  %v909 = vadd.f32 0.0, %v908
  %v910 = vpop.f32.mrf.mxu0
  %911 = vmatprep.mubr.f32.mxu0 0.0
  %912 = vmatmul.mubr.f32.gmra.mxu0 %v806
  %v913 = vpop.f32.mrf.mxu0
  %v914 = vadd.f32 0.0, %v913
  %v915 = vpop.f32.mrf.mxu0
  %916 = vmatprep.mubr.f32.mxu0 0.0
  %917 = vmatmul.mubr.f32.gmra.mxu0 %v807
  %v918 = vpop.f32.mrf.mxu0
  %v919 = vadd.f32 0.0, %v918
  %v920 = vpop.f32.mrf.mxu0
  %921 = vmatprep.mubr.f32.mxu0 0.0
  %922 = vmatmul.mubr.f32.gmra.mxu0 %v808
  %v923 = vpop.f32.mrf.mxu0
  %v924 = vadd.f32 0.0, %v923
  %v925 = vpop.f32.mrf.mxu0
  %926 = vmatprep.mubr.f32.mxu0 0.0
  %927 = vmatmul.mubr.f32.gmra.mxu0 %v809
  %v928 = vpop.f32.mrf.mxu0
  %v929 = vadd.f32 0.0, %v928
  %v930 = vpop.f32.mrf.mxu0
  %931 = vmatprep.mubr.f32.mxu0 0.0
  %932 = vmatmul.mubr.f32.gmra.mxu0 %v810
  %v933 = vpop.f32.mrf.mxu0
  %v934 = vadd.f32 0.0, %v933
  %v935 = vpop.f32.mrf.mxu0
  %936 = vmatprep.mubr.f32.mxu0 0.0
  %937 = vmatmul.mubr.f32.gmra.mxu0 %v811
  %v938 = vpop.f32.mrf.mxu0
  %v939 = vadd.f32 0.0, %v938
  %v940 = vpop.f32.mrf.mxu0
  %941 = vmatprep.mubr.f32.mxu0 0.0
  %942 = vmatmul.mubr.f32.gmra.mxu0 %v812
  %v943 = vpop.f32.mrf.mxu0
  %v944 = vadd.f32 0.0, %v943
  %v945 = vpop.f32.mrf.mxu0
  %946 = vmatprep.mubr.f32.mxu0 0.0
  %947 = vmatmul.mubr.f32.gmra.mxu0 %v813
  %v948 = vpop.f32.mrf.mxu0
  %v949 = vadd.f32 0.0, %v948
  %v950 = vpop.f32.mrf.mxu0
  %951 = vmatprep.mubr.f32.mxu0 0.0
  %952 = vmatmul.mubr.f32.gmra.mxu0 %v814
  %v953 = vpop.f32.mrf.mxu0
  %v954 = vadd.f32 0.0, %v953
  %v955 = vpop.f32.mrf.mxu0
  %956 = vmatprep.mubr.f32.mxu0 0.0
  %957 = vmatmul.mubr.f32.gmra.mxu0 %v815
  %v958 = vpop.f32.mrf.mxu0
  %v959 = vadd.f32 0.0, %v958
  %v960 = vpop.f32.mrf.mxu0
  %961 = vdwg.mxu0
  %962 = vst [vmem:[%s3] sm:$0xff] %v899
  %963 = vst [vmem:[%s3 + $0x8] sm:$0xff] %v904
  %964 = vst [vmem:[%s3 + $0x10] sm:$0xff] %v909
  %965 = vst [vmem:[%s3 + $0x18] sm:$0xff] %v914
  %966 = vst [vmem:[%s3 + $0x20] sm:$0xff] %v919
  %967 = vst [vmem:[%s3 + $0x28] sm:$0xff] %v924
  %968 = vst [vmem:[%s3 + $0x30] sm:$0xff] %v929
  %969 = vst [vmem:[%s3 + $0x38] sm:$0xff] %v934
  %970 = vst [vmem:[%s3 + $0x40] sm:$0xff] %v939
  %971 = vst [vmem:[%s3 + $0x48] sm:$0xff] %v944
  %972 = vst [vmem:[%s3 + $0x50] sm:$0xff] %v949
  %973 = vst [vmem:[%s3 + $0x58] sm:$0xff] %v954
  %974 = vst [vmem:[%s3 + $0x60] sm:$0xff] %v959
  // Predicated region
  $region14: #{model_forward.1} parent=0 // pred_check
    _
  $region15: #{model_forward.1} parent=0 // pred_check_branch
    %976 = sbr.rel (0) target = $region17
  $region16: #{model_forward.1} parent=0 // pred_region
    _
  $region17: #{model_forward.1} parent=0 // pred_fallthru
    _
  // Predicated region
  $region18: #{model_forward.1} parent=0 // pred_check
    _
  $region19: #{model_forward.1} parent=0 // pred_check_branch
    %978 = sbr.rel (0) target = $region21
  $region20: #{model_forward.1} parent=0 // pred_region
    _
  $region21: #{model_forward.1} parent=0 // pred_fallthru
    _

</llo_original>
